<compile_context>
chip_gen: v7x
topology: tpu7x:2x2x1
jax: 0.10.0
libtpu: 0.0.40
codegen_flags: <defaults>
</compile_context>

<pallas_src>
import functools

import jax
import jax.numpy as jnp
from jax import lax
from jax.experimental import pallas as pl
from jax.experimental.pallas import tpu as pltpu

DELTA = 0.7
GAMMA = 0.75
EPSILON = 1e-07

_LANES = 128
_SUBLANES = 8


def _tpu_vmem_capacity_bytes():
    """Physical VMEM capacity; conservative (v7x-sized) fallback if the query fails."""
    try:
        cap = getattr(pltpu.get_tpu_info(), "vmem_capacity_bytes", None)
        if cap:
            return int(cap)
    except Exception:
        pass
    return 64 * 1024 * 1024


def _aftl_kernel(yp_ref, yt_ref, dice_ref, acc_tp=None, acc_t=None, acc_p=None, *,
                 delta, epsilon, tile_rows, valid_len, mask_last, single_tile):
    """One (batch-tile, spatial-tile) grid step.

    yp_ref / yt_ref : (B, R, 128)  lane-dense flattened (H*W*C) chunks
    dice_ref        : (B, 1, 2)    per-class dice (written once per image)
    acc_*           : (B, 8, 128)  f32 accumulators (multi-tile path only)
    """
    b, r, l = yp_ref.shape
    t = pl.program_id(1)

    def load(masked):
        yp = jnp.clip(yp_ref[...].astype(jnp.float32), epsilon, 1.0 - epsilon)
        yt = yt_ref[...].astype(jnp.float32)
        if masked:
            # Mask BOTH tensors: contents past the array end of a ragged last block
            # are undefined, and clipped y_pred padding would pollute sum(y_pred).
            row = lax.broadcasted_iota(jnp.int32, (b, r, l), 1)
            lane = lax.broadcasted_iota(jnp.int32, (b, r, l), 2)
            gidx = (t * tile_rows + row) * _LANES + lane
            keep = gidx < valid_len
            yp = jnp.where(keep, yp, 0.0)
            yt = jnp.where(keep, yt, 0.0)
        return yp, yt

    def rowsum8(x):  # (B, R, 128) -> (B, 8, 128) via cheap VPU adds (R % 8 == 0)
        return jnp.sum(x.reshape(b, r // _SUBLANES, _SUBLANES, l), axis=1)

    def finalize(sum_tp, sum_t, sum_p):  # each (B, 1, 128)
        lane = lax.broadcasted_iota(jnp.int32, (1, 1, l), 2)
        even = (lane % 2 == 0).astype(jnp.float32)  # class-0 lanes (C == 2)

        def per_class(v):
            c0 = jnp.sum(v * even, axis=2, keepdims=True)
            tot = jnp.sum(v, axis=2, keepdims=True)
            return c0, tot - c0

        tp0, tp1 = per_class(sum_tp)
        st0, st1 = per_class(sum_t)
        sp0, sp1 = per_class(sum_p)

        def dice(tp, s_t, s_p):
            fn = s_t - tp
            fp = s_p - tp
            return (tp + epsilon) / (tp + delta * fn + (1.0 - delta) * fp + epsilon)

        d0 = dice(tp0, st0, sp0)
        d1 = dice(tp1, st1, sp1)
        cls = lax.broadcasted_iota(jnp.int32, (b, 1, 2), 2)
        dice_ref[...] = jnp.where(cls == 0, d0, d1)   # single (B, 1, 2) store

    if single_tile:
        # Whole image in one tile: skip the accumulator read-modify-write entirely.
        yp, yt = load(mask_last)
        finalize(jnp.sum(yt * yp, axis=1, keepdims=True),
                 jnp.sum(yt, axis=1, keepdims=True),
                 jnp.sum(yp, axis=1, keepdims=True))
        return

    last = pl.num_programs(1) - 1

    @pl.when(t == 0)
    def _init():
        acc_tp[...] = jnp.zeros_like(acc_tp)
        acc_t[...] = jnp.zeros_like(acc_t)
        acc_p[...] = jnp.zeros_like(acc_p)

    def accumulate(masked):
        yp, yt = load(masked)
        acc_tp[...] += rowsum8(yt * yp)
        acc_t[...] += rowsum8(yt)
        acc_p[...] += rowsum8(yp)

    if mask_last:
        @pl.when(t < last)
        def _interior():
            accumulate(False)

        @pl.when(t == last)
        def _tail():
            accumulate(True)
    else:
        accumulate(False)

    @pl.when(t == last)
    def _final():
        finalize(jnp.sum(acc_tp[...], axis=1, keepdims=True),
                 jnp.sum(acc_t[...], axis=1, keepdims=True),
                 jnp.sum(acc_p[...], axis=1, keepdims=True))


def asymmetric_focal_tversky_loss(y_pred, y_true, delta=DELTA, gamma=GAMMA,
                                  epsilon=EPSILON, block_bytes=None):
    """Forward pass matching AsymmetricFocalTverskyLoss on 4-D NHWC inputs."""
    assert y_pred.ndim == 4, "Metric: Shape of tensor is neither 2D or 3D."
    N, H, W, C = y_pred.shape
    assert C == 2, "binary segmentation expects 2 class channels (last axis)"
    assert y_true.shape == y_pred.shape

    L = H * W * C                              # flat per-image length (lane-dense)
    rows = -(-L // _LANES)                     # cdiv
    L_pad = rows * _LANES

    # --- generation-aware block sizing --------------------------------------
    big_vmem = _tpu_vmem_capacity_bytes() >= 96 * 1024 * 1024   # v5e/v6e: 128 MiB
    vmem_limit = (64 if big_vmem else 40) * 1024 * 1024         # v7x: 64 MiB/TC
    if block_bytes is None:
        block_bytes = (8 if big_vmem else 4) * 1024 * 1024      # per input block
    itemsize = max(jnp.dtype(y_pred.dtype).itemsize, jnp.dtype(y_true.dtype).itemsize)
    target_rows = max(_SUBLANES, block_bytes // (_LANES * itemsize))

    if rows <= target_rows:
        # Whole image in one spatial tile: no accumulators.  Pack images per block,
        # but keep >= 2 steps on the (parallel) batch axis so both v7x cores work.
        R, T = rows, 1
        max_b = max(1, target_rows // max(rows, 1))
        if N >= 2:
            max_b = min(max_b, N // 2)
        max_b = min(max_b, N, 256)
        B = next(d for d in range(max_b, 0, -1) if N % d == 0)
    else:
        # Grow R before packing B: keeps accumulator RMW traffic ~24/R of input bytes.
        B = 1
        R = max(_SUBLANES, (target_rows // _SUBLANES) * _SUBLANES)
        T = -(-rows // R)
    # TODO(synk): when N == 1 and T > 1, split the spatial axis over a second parallel
    # grid axis (partial sums combined in the wrapper) so both v7x TensorCores get work.

    mask_last = (T * R * _LANES != L)          # ragged last rows and/or padded lanes
    single_tile = (T == 1)
    assert T * R * _LANES < 2 ** 31, "per-image index math would overflow int32"

    def prep(x):
        x = x.reshape(N, L)                    # free view of contiguous NHWC
        if L_pad != L:
            # Rare fallback (H*W*C % 128 != 0): pads <= 127 elements per image but
            # costs one extra HBM pass since XLA materializes the pad.
            # TODO(synk): absorb the lane-ragged tail via 2-D blocks or a second tiny
            # pallas_call to avoid this copy.
            x = jnp.pad(x, ((0, 0), (0, L_pad - L)))
        return x.reshape(N, rows, _LANES)      # lane-dense, no transpose

    ypf = prep(y_pred)
    ytf = prep(y_true)

    kernel = functools.partial(
        _aftl_kernel, delta=float(delta), epsilon=float(epsilon), tile_rows=R,
        valid_len=L, mask_last=mask_last, single_tile=single_tile)

    scratch = [] if single_tile else [
        pltpu.VMEM((B, _SUBLANES, _LANES), jnp.float32),
        pltpu.VMEM((B, _SUBLANES, _LANES), jnp.float32),
        pltpu.VMEM((B, _SUBLANES, _LANES), jnp.float32),
    ]

    dice_out = pl.pallas_call(
        kernel,
        out_shape=jax.ShapeDtypeStruct((N, 1, 2), jnp.float32),
        grid_spec=pltpu.PrefetchScalarGridSpec(
            num_scalar_prefetch=0,
            grid=(N // B, T),
            in_specs=[
                pl.BlockSpec((B, R, _LANES), lambda b, t: (b, t, 0)),
                pl.BlockSpec((B, R, _LANES), lambda b, t: (b, t, 0)),
            ],
            out_specs=pl.BlockSpec((B, 1, 2), lambda b, t: (b, 0, 0)),
            scratch_shapes=scratch,
        ),
        compiler_params=pltpu.CompilerParams(
            dimension_semantics=("parallel", "arbitrary"),
            vmem_limit_bytes=vmem_limit,
        ),
    )(ypf, ytf)

    dice_class = dice_out[:, 0, :]                          # (N, 2)
    back_dice = 1.0 - dice_class[:, 0]
    fore = 1.0 - dice_class[:, 1]
    # Literal PyTorch form (1-d)*(1-d)^(-gamma); epsilon clipping keeps dice < 1.
    fore_dice = fore * jnp.power(fore, -gamma)
    loss = jnp.mean(jnp.stack([back_dice, fore_dice], axis=-1))
    return loss


def _reference_jax(y_pred, y_true, delta=DELTA, gamma=GAMMA, epsilon=EPSILON):
    """Pure-JAX reference mirroring the PyTorch forward, for validation."""
    yp = jnp.clip(y_pred, epsilon, 1.0 - epsilon)
    tp = jnp.sum(y_true * yp, axis=(1, 2))
    fn = jnp.sum(y_true * (1.0 - yp), axis=(1, 2))
    fp = jnp.sum((1.0 - y_true) * yp, axis=(1, 2))
    dice = (tp + epsilon) / (tp + delta * fn + (1.0 - delta) * fp + epsilon)
    back = 1.0 - dice[:, 0]
    fore = (1.0 - dice[:, 1]) * jnp.power(1.0 - dice[:, 1], -gamma)
    return jnp.mean(jnp.stack([back, fore], axis=-1))


if __name__ == "__main__":
    key = jax.random.PRNGKey(0)

    def make_inputs(k, n, h, w):
        k1, k2 = jax.random.split(k)
        logits = jax.random.normal(k1, (n, h, w, 2), dtype=jnp.float32)
        y_pred = jax.nn.softmax(logits, axis=-1)
        labels = jax.random.randint(k2, (n, h, w), 0, 2)
        y_true = jax.nn.one_hot(labels, 2, dtype=jnp.float32)
        return y_pred, y_true

    ks = jax.random.split(key, 4)

    # 1) module-scale shape: single-tile fast path, no padding, no mask.
    yp, yt = make_inputs(ks[0], 2, 16, 16)
    got = jax.block_until_ready(asymmetric_focal_tversky_loss(yp, yt))
    want = jax.block_until_ready(_reference_jax(yp, yt))
    assert jnp.allclose(got, want, rtol=1e-5, atol=1e-5), (got, want)

    # 2) tiny forced block size: multi-tile accumulators + ragged, masked last tile.
    yp, yt = make_inputs(ks[1], 2, 24, 24)      # rows = 9, R = 8 -> T = 2, ragged
    got = jax.block_until_ready(
        asymmetric_focal_tversky_loss(yp, yt, block_bytes=8 * _LANES * 4))
    want = jax.block_until_ready(_reference_jax(yp, yt))
    assert jnp.allclose(got, want, rtol=1e-5, atol=1e-5), (got, want)

    # 3) H*W*C not a multiple of 128: minimal-pad fallback + masked single tile.
    yp, yt = make_inputs(ks[2], 1, 5, 5)
    got = jax.block_until_ready(asymmetric_focal_tversky_loss(yp, yt))
    want = jax.block_until_ready(_reference_jax(yp, yt))
    assert jnp.allclose(got, want, rtol=1e-5, atol=1e-5), (got, want)

    # 4) batch packing: B = 2 images per block while keeping 2 batch grid steps.
    yp, yt = make_inputs(ks[3], 4, 16, 16)
    got = jax.block_until_ready(asymmetric_focal_tversky_loss(yp, yt))
    want = jax.block_until_ready(_reference_jax(yp, yt))
    assert jnp.allclose(got, want, rtol=1e-5, atol=1e-5), (got, want)

    print("KERNEL_OK")
</pallas_src>

<mosaic_0001>
module attributes {stable_mosaic.version = 11 : i64} {
  func.func @_aftl_kernel(%arg0: i32, %arg1: i32, %arg2: memref<1x4x128xf32, #tpu.memory_space<vmem>>, %arg3: memref<1x4x128xf32, #tpu.memory_space<vmem>>, %arg4: memref<1x1x2xf32, #tpu.memory_space<vmem>>) attributes {dimension_semantics = [#tpu.dimension_semantics<parallel>, #tpu.dimension_semantics<arbitrary>], iteration_bounds = array<i64: 2, 1>, scalar_prefetch = 0 : i64, scratch_operands = 0 : i64, tpu.core_type = #tpu.core_type<tc>, window_params = [{transform_indices = @transform_0, window_bounds = array<i64: 1, 4, 128>}, {transform_indices = @transform_1, window_bounds = array<i64: 1, 4, 128>}, {transform_indices = @transform_2, window_bounds = array<i64: 1, 1, 2>}]} {
    %c0 = arith.constant 0 : index
    %c0_0 = arith.constant 0 : index
    %c0_1 = arith.constant 0 : index
    %0 = vector.load %arg2[%c0, %c0_0, %c0_1] : memref<1x4x128xf32, #tpu.memory_space<vmem>>, vector<1x4x128xf32>
    %cst = arith.constant 1.000000e-07 : f32
    %cst_2 = arith.constant 0.99999988 : f32
    %1 = vector.broadcast %cst : f32 to vector<1x4x128xf32>
    %2 = arith.maximumf %1, %0 : vector<1x4x128xf32>
    %3 = vector.broadcast %cst_2 : f32 to vector<1x4x128xf32>
    %4 = arith.minimumf %3, %2 : vector<1x4x128xf32>
    %c0_3 = arith.constant 0 : index
    %c0_4 = arith.constant 0 : index
    %c0_5 = arith.constant 0 : index
    %5 = vector.load %arg3[%c0_3, %c0_4, %c0_5] : memref<1x4x128xf32, #tpu.memory_space<vmem>>, vector<1x4x128xf32>
    %6 = arith.mulf %5, %4 : vector<1x4x128xf32>
    %cst_6 = arith.constant dense<0.000000e+00> : vector<1x128xf32>
    %7 = vector.multi_reduction <add>, %6, %cst_6 [1] : vector<1x4x128xf32> to vector<1x128xf32>
    %8 = vector.shape_cast %7 : vector<1x128xf32> to vector<1x1x128xf32>
    %cst_7 = arith.constant dense<0.000000e+00> : vector<1x128xf32>
    %9 = vector.multi_reduction <add>, %5, %cst_7 [1] : vector<1x4x128xf32> to vector<1x128xf32>
    %10 = vector.shape_cast %9 : vector<1x128xf32> to vector<1x1x128xf32>
    %cst_8 = arith.constant dense<0.000000e+00> : vector<1x128xf32>
    %11 = vector.multi_reduction <add>, %4, %cst_8 [1] : vector<1x4x128xf32> to vector<1x128xf32>
    %12 = vector.shape_cast %11 : vector<1x128xf32> to vector<1x1x128xf32>
    %13 = tpu.iota {dimensions = array<i32: 2>} : vector<1x1x128xi32>
    %c2_i32 = arith.constant 2 : i32
    %c0_i32 = arith.constant 0 : i32
    %14 = arith.cmpi eq, %c2_i32, %c0_i32 : i32
    %c1_i32 = arith.constant 1 : i32
    %15 = arith.select %14, %c1_i32, %c2_i32 : i32
    %16 = vector.broadcast %15 : i32 to vector<1x1x128xi32>
    %17 = arith.remsi %13, %16 : vector<1x1x128xi32>
    %c0_i32_9 = arith.constant 0 : i32
    %18 = vector.broadcast %c0_i32_9 : i32 to vector<1x1x128xi32>
    %19 = arith.cmpi ne, %17, %18 : vector<1x1x128xi32>
    %c0_i32_10 = arith.constant 0 : i32
    %20 = vector.broadcast %c0_i32_10 : i32 to vector<1x1x128xi32>
    %21 = arith.cmpi slt, %17, %20 : vector<1x1x128xi32>
    %c0_i32_11 = arith.constant 0 : i32
    %22 = arith.cmpi slt, %15, %c0_i32_11 : i32
    %23 = vector.broadcast %22 : i1 to vector<1x1x128xi1>
    %24 = vector.broadcast %23 : vector<1x1x128xi1> to vector<1x1x128xi1>
    %25 = arith.xori %21, %24 : vector<1x1x128xi1>
    %26 = arith.andi %25, %19 : vector<1x1x128xi1>
    %27 = vector.broadcast %15 : i32 to vector<1x1x128xi32>
    %28 = arith.addi %17, %27 : vector<1x1x128xi32>
    %29 = arith.select %26, %28, %17 : vector<1x1x128xi1>, vector<1x1x128xi32>
    %c0_i32_12 = arith.constant 0 : i32
    %30 = vector.broadcast %c0_i32_12 : i32 to vector<1x1x128xi32>
    %31 = arith.cmpi eq, %29, %30 : vector<1x1x128xi32>
    %32 = arith.extui %31 : vector<1x1x128xi1> to vector<1x1x128xi32>
    %33 = arith.sitofp %32 : vector<1x1x128xi32> to vector<1x1x128xf32>
    %34 = arith.mulf %8, %33 : vector<1x1x128xf32>
    %cst_13 = arith.constant dense<0.000000e+00> : vector<1x1xf32>
    %35 = vector.multi_reduction <add>, %34, %cst_13 [2] : vector<1x1x128xf32> to vector<1x1xf32>
    %36 = vector.shape_cast %35 : vector<1x1xf32> to vector<1x1x1xf32>
    %cst_14 = arith.constant dense<0.000000e+00> : vector<1x1xf32>
    %37 = vector.multi_reduction <add>, %8, %cst_14 [2] : vector<1x1x128xf32> to vector<1x1xf32>
    %38 = vector.shape_cast %37 : vector<1x1xf32> to vector<1x1x1xf32>
    %39 = arith.subf %38, %36 : vector<1x1x1xf32>
    %40 = arith.mulf %10, %33 : vector<1x1x128xf32>
    %cst_15 = arith.constant dense<0.000000e+00> : vector<1x1xf32>
    %41 = vector.multi_reduction <add>, %40, %cst_15 [2] : vector<1x1x128xf32> to vector<1x1xf32>
    %42 = vector.shape_cast %41 : vector<1x1xf32> to vector<1x1x1xf32>
    %cst_16 = arith.constant dense<0.000000e+00> : vector<1x1xf32>
    %43 = vector.multi_reduction <add>, %10, %cst_16 [2] : vector<1x1x128xf32> to vector<1x1xf32>
    %44 = vector.shape_cast %43 : vector<1x1xf32> to vector<1x1x1xf32>
    %45 = arith.subf %44, %42 : vector<1x1x1xf32>
    %46 = arith.mulf %12, %33 : vector<1x1x128xf32>
    %cst_17 = arith.constant dense<0.000000e+00> : vector<1x1xf32>
    %47 = vector.multi_reduction <add>, %46, %cst_17 [2] : vector<1x1x128xf32> to vector<1x1xf32>
    %48 = vector.shape_cast %47 : vector<1x1xf32> to vector<1x1x1xf32>
    %cst_18 = arith.constant dense<0.000000e+00> : vector<1x1xf32>
    %49 = vector.multi_reduction <add>, %12, %cst_18 [2] : vector<1x1x128xf32> to vector<1x1xf32>
    %50 = vector.shape_cast %49 : vector<1x1xf32> to vector<1x1x1xf32>
    %51 = arith.subf %50, %48 : vector<1x1x1xf32>
    %52 = arith.subf %42, %36 : vector<1x1x1xf32>
    %53 = arith.subf %48, %36 : vector<1x1x1xf32>
    %cst_19 = arith.constant 1.000000e-07 : f32
    %54 = vector.broadcast %cst_19 : f32 to vector<1x1x1xf32>
    %55 = arith.addf %36, %54 : vector<1x1x1xf32>
    %cst_20 = arith.constant 0.699999988 : f32
    %56 = vector.broadcast %cst_20 : f32 to vector<1x1x1xf32>
    %57 = arith.mulf %56, %52 : vector<1x1x1xf32>
    %58 = arith.addf %36, %57 : vector<1x1x1xf32>
    %cst_21 = arith.constant 3.000000e-01 : f32
    %59 = vector.broadcast %cst_21 : f32 to vector<1x1x1xf32>
    %60 = arith.mulf %59, %53 : vector<1x1x1xf32>
    %61 = arith.addf %58, %60 : vector<1x1x1xf32>
    %cst_22 = arith.constant 1.000000e-07 : f32
    %62 = vector.broadcast %cst_22 : f32 to vector<1x1x1xf32>
    %63 = arith.addf %61, %62 : vector<1x1x1xf32>
    %64 = arith.divf %55, %63 : vector<1x1x1xf32>
    %65 = arith.subf %45, %39 : vector<1x1x1xf32>
    %66 = arith.subf %51, %39 : vector<1x1x1xf32>
    %cst_23 = arith.constant 1.000000e-07 : f32
    %67 = vector.broadcast %cst_23 : f32 to vector<1x1x1xf32>
    %68 = arith.addf %39, %67 : vector<1x1x1xf32>
    %cst_24 = arith.constant 0.699999988 : f32
    %69 = vector.broadcast %cst_24 : f32 to vector<1x1x1xf32>
    %70 = arith.mulf %69, %65 : vector<1x1x1xf32>
    %71 = arith.addf %39, %70 : vector<1x1x1xf32>
    %cst_25 = arith.constant 3.000000e-01 : f32
    %72 = vector.broadcast %cst_25 : f32 to vector<1x1x1xf32>
    %73 = arith.mulf %72, %66 : vector<1x1x1xf32>
    %74 = arith.addf %71, %73 : vector<1x1x1xf32>
    %cst_26 = arith.constant 1.000000e-07 : f32
    %75 = vector.broadcast %cst_26 : f32 to vector<1x1x1xf32>
    %76 = arith.addf %74, %75 : vector<1x1x1xf32>
    %77 = arith.divf %68, %76 : vector<1x1x1xf32>
    %78 = tpu.iota {dimensions = array<i32: 2>} : vector<1x1x2xi32>
    %c0_i32_27 = arith.constant 0 : i32
    %79 = vector.broadcast %c0_i32_27 : i32 to vector<1x1x2xi32>
    %80 = arith.cmpi eq, %78, %79 : vector<1x1x2xi32>
    %81 = vector.shape_cast %64 : vector<1x1x1xf32> to vector<1x1x1xf32>
    %82 = vector.broadcast %81 : vector<1x1x1xf32> to vector<1x1x2xf32>
    %83 = vector.shape_cast %77 : vector<1x1x1xf32> to vector<1x1x1xf32>
    %84 = vector.broadcast %83 : vector<1x1x1xf32> to vector<1x1x2xf32>
    %85 = arith.select %80, %82, %84 : vector<1x1x2xi1>, vector<1x1x2xf32>
    %c0_28 = arith.constant 0 : index
    %c0_29 = arith.constant 0 : index
    %c0_30 = arith.constant 0 : index
    %86 = vector.load %arg4[%c0_28, %c0_29, %c0_30] : memref<1x1x2xf32, #tpu.memory_space<vmem>>, vector<1x1x2xf32>
    tpu.vector_store %arg4[%c0_28, %c0_29, %c0_30], %85 {strides = array<i32>} : memref<1x1x2xf32, #tpu.memory_space<vmem>>, vector<1x1x2xf32>,
    return
  }
  func.func @transform_0(%arg0: i32, %arg1: i32) -> (i32, i32, i32) {
    %c0_i32 = arith.constant 0 : i32
    %c0_i32_0 = arith.constant 0 : i32
    return %arg0, %arg1, %c0_i32 : i32, i32, i32
  }
  func.func @transform_1(%arg0: i32, %arg1: i32) -> (i32, i32, i32) {
    %c0_i32 = arith.constant 0 : i32
    %c0_i32_0 = arith.constant 0 : i32
    return %arg0, %arg1, %c0_i32 : i32, i32, i32
  }
  func.func @transform_2(%arg0: i32, %arg1: i32) -> (i32, i32, i32) {
    %c0_i32 = arith.constant 0 : i32
    %c0_i32_0 = arith.constant 0 : i32
    %c0_i32_1 = arith.constant 0 : i32
    return %arg0, %c0_i32, %c0_i32_0 : i32, i32, i32
  }
}

</mosaic_0001>

<llo_original>
// kernel: tpu_custom_call.1
$region0: #{tpu_custom_call.1}
  #allocation0 [shape = 'u32[]', space=smem, size = 0x4, offset = 0x4, fixed_abs, tag = 'smem constant byte address 0x4 - core index']
  #allocation1 [shape = 'u32[144,128]{1,0:T(1,128)}', space=vmem, size = 0x12000, scoped, tag = 'internal scratch']
  %s0 = inlined_call_operand.hbm [shape: f32[2,4,128], index: 0, kind: input, shape index: {}]
  %s1 = inlined_call_operand.hbm [shape: f32[2,4,128], index: 1, kind: input, shape index: {}]
  %s2 = inlined_call_operand.hbm [shape: f32[2,1,2], index: 2, kind: output, shape index: {}]
  %s3 = sld [smem:[#allocation0]]
  $region49: #{tpu_custom_call.1} parent=0
    _
  %s5 = ssub.s32 1, %s3
  %s6 = scalar_select 0, %s5, %s3
  $region1: #{tpu_custom_call.1} parent=0
    #allocation2 [shape = 'u8[4096]{0}', space=vmem, size = 0x1000, scoped, tag = 'input window, operand 0']
    #allocation3 [shape = 's32[2]{0}', space=sflag, size = 0x8, scoped, tag = 'scoped memory for tpu_custom_call.1']
    #allocation4 [shape = 's32[2]{0}', space=sflag, size = 0x8, scoped, tag = 'scoped memory for tpu_custom_call.1']
    #allocation5 [shape = 'u8[4096]{0}', space=vmem, size = 0x1000, scoped, tag = 'input window, operand 1']
    #allocation6 [shape = 's32[2]{0}', space=sflag, size = 0x8, scoped, tag = 'scoped memory for tpu_custom_call.1']
    #allocation7 [shape = 'u8[1024]{0}', space=vmem, size = 0x400, scoped, tag = 'output window, operand 0']
    %7 = vsyncpa [#allocation3], 0
    %s8 = scalar_lea.sflag [#allocation3], 1
    %9 = vsyncpa %s8, 0
    %10 = vsyncpa [#allocation6], 0
    %s11 = scalar_lea.sflag [#allocation6], 1
    %12 = vsyncpa %s11, 0
    %13 = vsyncpa [#allocation4], 0
    %s14 = scalar_lea.sflag [#allocation4], 1
    %15 = vsyncpa %s14, 0
    loop: start=0, step=1, limit=4
    $region2: #{tpu_custom_call.1} parent=1 // loop_pre_header
      _
    $region3: #{tpu_custom_call.1} parent=1 // loop_header
      %s17 = sphi 0, %s21
      %p18 = scmp.ge.s32.totalorder %s17, 4
      %s24 = sphi 0, %s36
      %s25 = sphi 0, %s32
      %s26 = sphi 0, %s24
      %s27 = sphi 0, %s25
      %s28 = sphi 0, %s26
      %s29 = sphi 0, %s27
      %s41 = sphi 0, %s43
      %s44 = sphi 0, %s41
      %s45 = sphi 0, %s44
      %s61 = sphi 0, %s45
      %s69 = sphi 0, %s71
      %s72 = sphi 0, %s69
      %s73 = sphi 0, %s72
      %s89 = sphi 0, %s73
      %s95 = sphi 0, %s97
      %s98 = sphi 0, %s95
      %s99 = sphi 0, %s98
      %s115 = sphi 0, %s99
    $region4: #{tpu_custom_call.1} parent=1 // loop_header_branch
      %20 = sbr.rel (%p18) target = $region8
    $region5: #{tpu_custom_call.1} parent=1 // loop_body
      %s22 = ssub.s32 %s17, 1
      %s23 = ssub.s32 %s17, 2
      %s30 = sadd.s32 1, %s25
      %p31 = scmp.ge.s32.totalorder %s30, 1
      %s32 = scalar_select %p31, 0, %s30
      %s33 = sadd.s32 1, %s24
      %s34 = scalar_select %p31, %s33, %s24
      %p35 = scmp.ge.s32.totalorder %s34, 2
      %s36 = scalar_select %p35, 0, %s34
      %s37 = ssub.s32 %s24, %s36
      %s38 = ssub.s32 %s25, %s32
      %s39 = sor.u32 %s37, %s38
      %p40 = scmp.eq.s32.totalorder %s39, 0
      %s42 = sadd.s32 %s41, 1
      %s43 = scalar_select %p40, %s41, %s42
      %p46 = pneg %p40
      %p47 = scmp.eq.s32.totalorder %s17, 1
      %p48 = por %p46, %p47
      %p49 = scmp.ne.s32.totalorder %s41, %s44
      %p50 = scmp.eq.s32.totalorder %s17, 0
      %p51 = por %p49, %p50
      %p52 = scmp.ne.s32.totalorder %s41, %s44
      %p53 = scmp.eq.s32.totalorder %s22, 1
      %p54 = por %p52, %p53
      %p55 = scmp.ne.s32.totalorder %s44, %s45
      %p56 = scmp.eq.s32.totalorder %s22, 0
      %p57 = por %p55, %p56
      %p58 = scmp.ne.s32.totalorder %s44, %s45
      %p59 = scmp.eq.s32.totalorder %s23, 1
      %p60 = por %p58, %p59
      %p62 = scmp.ne.s32.totalorder %s45, %s61
      %p63 = scmp.eq.s32.totalorder %s23, 0
      %p64 = por %p62, %p63
      %s65 = ssub.s32 %s24, %s36
      %s66 = ssub.s32 %s25, %s32
      %s67 = sor.u32 %s65, %s66
      %p68 = scmp.eq.s32.totalorder %s67, 0
      %s70 = sadd.s32 %s69, 1
      %s71 = scalar_select %p68, %s69, %s70
      %p74 = pneg %p68
      %p75 = scmp.eq.s32.totalorder %s17, 1
      %p76 = por %p74, %p75
      %p77 = scmp.ne.s32.totalorder %s69, %s72
      %p78 = scmp.eq.s32.totalorder %s17, 0
      %p79 = por %p77, %p78
      %p80 = scmp.ne.s32.totalorder %s69, %s72
      %p81 = scmp.eq.s32.totalorder %s22, 1
      %p82 = por %p80, %p81
      %p83 = scmp.ne.s32.totalorder %s72, %s73
      %p84 = scmp.eq.s32.totalorder %s22, 0
      %p85 = por %p83, %p84
      %p86 = scmp.ne.s32.totalorder %s72, %s73
      %p87 = scmp.eq.s32.totalorder %s23, 1
      %p88 = por %p86, %p87
      %p90 = scmp.ne.s32.totalorder %s73, %s89
      %p91 = scmp.eq.s32.totalorder %s23, 0
      %p92 = por %p90, %p91
      %s93 = ssub.s32 %s24, %s36
      %p94 = scmp.eq.s32.totalorder %s93, 0
      %s96 = sadd.s32 %s95, 1
      %s97 = scalar_select %p94, %s95, %s96
      %p100 = pneg %p94
      %p101 = scmp.eq.s32.totalorder %s17, 1
      %p102 = por %p100, %p101
      %p103 = scmp.ne.s32.totalorder %s95, %s98
      %p104 = scmp.eq.s32.totalorder %s17, 0
      %p105 = por %p103, %p104
      %p106 = scmp.ne.s32.totalorder %s95, %s98
      %p107 = scmp.eq.s32.totalorder %s22, 1
      %p108 = por %p106, %p107
      %p109 = scmp.ne.s32.totalorder %s98, %s99
      %p110 = scmp.eq.s32.totalorder %s22, 0
      %p111 = por %p109, %p110
      %p112 = scmp.ne.s32.totalorder %s98, %s99
      %p113 = scmp.eq.s32.totalorder %s23, 1
      %p114 = por %p112, %p113
      %p116 = scmp.ne.s32.totalorder %s99, %s115
      %p117 = scmp.eq.s32.totalorder %s23, 0
      %p118 = por %p116, %p117
      %p119 = scmp.le.s32.totalorder 1, %s17
      %p120 = scmp.lt.s32.totalorder %s17, 3
      %p121 = pnand %p119, %p120
      %p122 = pneg %p121
      // Predicated region
      $region9: #{tpu_custom_call.1} parent=5 // pred_check
        _
      $region10: #{tpu_custom_call.1} parent=5 // pred_check_branch
        %124 = sbr.rel (%p121) target = $region12
      $region11: #{tpu_custom_call.1} parent=5 // pred_region
        %s125 = ssub.s32 %s17, 1
      $region12: #{tpu_custom_call.1} parent=5 // pred_fallthru
        _
      %p126 = scmp.lt.s32.totalorder %s17, 2
      // Predicated region
      $region13: #{tpu_custom_call.1} parent=5 // pred_check
        %p127 = pneg %p126
      $region14: #{tpu_custom_call.1} parent=5 // pred_check_branch
        %129 = sbr.rel (%p127) target = $region16
      $region15: #{tpu_custom_call.1} parent=5 // pred_region
        // Predicated region
        $region17: #{tpu_custom_call.1} parent=15 // pred_check
          %p130 = pneg %p51
        $region18: #{tpu_custom_call.1} parent=15 // pred_check_branch
          %132 = sbr.rel (%p130) target = $region20
        $region19: #{tpu_custom_call.1} parent=15 // pred_region
          %s133 = sand.u32 %s41, 1
          %s134 = scalar_lea.sflag [#allocation3], %s133
          %s135 = sand.u32 %s41, 1
          %s136 = smul.addr %s135, 4
          %s137 = scalar_lea.vmem [#allocation2], %s136
          %s139 = ssub.s32 64, 64
          %140 = vsyncadd %s134, %s139
          %s141 = sadd.s32 %s25, %s24
          %s142 = smul.addr %s141, 64
          %s143 = scalar_lea.hbm %s0, %s142
          %s145 = sshll.u32 %s137, 4
          %s146 = int_to_ptr.vmem [resolvable:$true] %s145
          %148 = dma.hbm_to_vmem [thread:$0]  %s143, 64, %s146, %s134
        $region20: #{tpu_custom_call.1} parent=15 // pred_fallthru
          _
        // Predicated region
        $region21: #{tpu_custom_call.1} parent=15 // pred_check
          %p149 = pneg %p79
        $region22: #{tpu_custom_call.1} parent=15 // pred_check_branch
          %151 = sbr.rel (%p149) target = $region24
        $region23: #{tpu_custom_call.1} parent=15 // pred_region
          %s152 = sand.u32 %s69, 1
          %s153 = scalar_lea.sflag [#allocation6], %s152
          %s154 = sand.u32 %s69, 1
          %s155 = smul.addr %s154, 4
          %s156 = scalar_lea.vmem [#allocation5], %s155
          %s158 = ssub.s32 64, 64
          %159 = vsyncadd %s153, %s158
          %s160 = sadd.s32 %s25, %s24
          %s161 = smul.addr %s160, 64
          %s162 = scalar_lea.hbm %s1, %s161
          %s164 = sshll.u32 %s156, 4
          %s165 = int_to_ptr.vmem [resolvable:$true] %s164
          %167 = dma.hbm_to_vmem [thread:$0]  %s162, 64, %s165, %s153
        $region24: #{tpu_custom_call.1} parent=15 // pred_fallthru
          _
      $region16: #{tpu_custom_call.1} parent=5 // pred_fallthru
        _
      %p168 = scmp.le.s32.totalorder 1, %s17
      %p169 = scmp.lt.s32.totalorder %s17, 3
      %p170 = pnand %p168, %p169
      %p171 = pneg %p170
      // Predicated region
      $region25: #{tpu_custom_call.1} parent=5 // pred_check
        _
      $region26: #{tpu_custom_call.1} parent=5 // pred_check_branch
        %173 = sbr.rel (%p170) target = $region28
      $region27: #{tpu_custom_call.1} parent=5 // pred_region
        %s174 = ssub.s32 %s17, 1
        %s175 = sand.u32 %s44, 1
        %s176 = scalar_lea.sflag [#allocation3], %s175
        %s177 = sand.u32 %s44, 1
        %s178 = smul.addr %s177, 4
        %s179 = scalar_lea.vmem [#allocation2], %s178
        // Predicated region
        $region29: #{tpu_custom_call.1} parent=27 // pred_check
          %p180 = pneg %p57
        $region30: #{tpu_custom_call.1} parent=27 // pred_check_branch
          %182 = sbr.rel (%p180) target = $region32
        $region31: #{tpu_custom_call.1} parent=27 // pred_region
          %183 = dma.done %s176, 64
        $region32: #{tpu_custom_call.1} parent=27 // pred_fallthru
          _
        %s184 = sand.u32 %s72, 1
        %s185 = scalar_lea.sflag [#allocation6], %s184
        %s186 = sand.u32 %s72, 1
        %s187 = smul.addr %s186, 4
        %s188 = scalar_lea.vmem [#allocation5], %s187
        // Predicated region
        $region33: #{tpu_custom_call.1} parent=27 // pred_check
          %p189 = pneg %p85
        $region34: #{tpu_custom_call.1} parent=27 // pred_check_branch
          %191 = sbr.rel (%p189) target = $region36
        $region35: #{tpu_custom_call.1} parent=27 // pred_region
          %192 = dma.done %s185, 64
        $region36: #{tpu_custom_call.1} parent=27 // pred_fallthru
          _
        %s193 = sand.u32 %s44, 1
        %s194 = scalar_lea.sflag [#allocation3], %s193
        %s195 = sand.u32 %s44, 1
        %s196 = smul.addr %s195, 4
        %s197 = scalar_lea.vmem [#allocation2], %s196
        %p198 = pneg %p57
        %p199 = pneg %p54
        %s200 = sand.u32 %s72, 1
        %s201 = scalar_lea.sflag [#allocation6], %s200
        %s202 = sand.u32 %s72, 1
        %s203 = smul.addr %s202, 4
        %s204 = scalar_lea.vmem [#allocation5], %s203
        %p205 = pneg %p85
        %p206 = pneg %p82
        %p207 = pneg %p111
        %p208 = pneg %p108
        %s209 = sand.u32 %s98, 1
        %s210 = scalar_lea.sflag [#allocation4], %s209
        %s211 = sand.u32 %s98, 1
        %s212 = scalar_lea.vmem [#allocation7], %s211
        %v213 = vld [vmem:[%s179] sm:$0xf]
        %v214 = vmax.f32 %v213, 1e-07
        %v215 = vmin.f32 %v214, 0.9999999
        %v216 = vld [vmem:[%s188] sm:$0xf]
        %v217 = vmul.f32 %v216, %v215
        %vm218 = vcmask 1043456
        %v219 = vsel %vm218, %v217, 0.0
        %v220 = vrot.slane %v219, 4
        %v221 = vadd.f32 %v219, %v220
        %v222 = vrot.slane %v221, 2
        %v223 = vadd.f32 %v221, %v222
        %v224 = vrot.slane %v223, 1
        %v225 = vadd.f32 %v223, %v224
        %v226 = vsel %vm218, %v216, 0.0
        %v227 = vrot.slane %v226, 4
        %v228 = vadd.f32 %v226, %v227
        %v229 = vrot.slane %v228, 2
        %v230 = vadd.f32 %v228, %v229
        %v231 = vrot.slane %v230, 1
        %v232 = vadd.f32 %v230, %v231
        %v233 = vsel %vm218, %v215, 0.0
        %v234 = vrot.slane %v233, 4
        %v235 = vadd.f32 %v233, %v234
        %v236 = vrot.slane %v235, 2
        %v237 = vadd.f32 %v235, %v236
        %v238 = vrot.slane %v237, 1
        %v239 = vadd.f32 %v237, %v238
        %v240 = vlaneseq
        %v241 = vand.u32 %v240, 127
        %vm242 = vcmp.lt.s32.totalorder %v241, 0
        %v243 = vsub.s32 0, %v241
        %v244 = vsel %vm242, %v243, %v241
        %v245 = vshrl.u32 %v244, 1
        %v246 = vand.u32 %v244, 1
        %v247 = vsub.s32 0, %v246
        %v248 = vsel %vm242, %v247, %v246
        %vm249 = vcmp.ne.s32.totalorder %v248, 0
        %vm250 = vcmp.lt.s32.totalorder %v248, 0
        %vm251 = vmand %vm250, %vm249
        %v252 = vadd.s32 %v248, 2
        %v253 = vsel %vm251, %v252, %v248
        %vm254 = vcmp.eq.s32.totalorder %v253, 0
        %v255 = vsel %vm254, 1, 0
        %v256 = vcvt.s32.f32 %v255
        %v257 = vmul.f32 %v225, %v256
        %258 = vadd.xlane.f32.xlu0 %v257
        %v259 = vpop.xlane.xlu0 %258
        %260 = vadd.xlane.f32.xlu0 %v225
        %v261 = vpop.xlane.xlu0 %260
        %v262 = vsub.f32 %v261, %v259
        %v263 = vmul.f32 %v232, %v256
        %264 = vadd.xlane.f32.xlu0 %v263
        %v265 = vpop.xlane.xlu0 %264
        %266 = vadd.xlane.f32.xlu0 %v232
        %v267 = vpop.xlane.xlu0 %266
        %v268 = vsub.f32 %v267, %v265
        %v269 = vmul.f32 %v239, %v256
        %270 = vadd.xlane.f32.xlu0 %v269
        %v271 = vpop.xlane.xlu0 %270
        %272 = vadd.xlane.f32.xlu0 %v239
        %v273 = vpop.xlane.xlu0 %272
        %v274 = vsub.f32 %v273, %v271
        %v275 = vsub.f32 %v265, %v259
        %v276 = vsub.f32 %v271, %v259
        %v277 = vadd.f32 %v259, 1e-07
        %v278 = vmul.f32 %v275, 0.7
        %v279 = vadd.f32 %v259, %v278
        %v280 = vmul.f32 %v276, 0.3
        %v281 = vadd.f32 %v279, %v280
        %v282 = vadd.f32 %v281, 1e-07
        %v283 = vrcp.pop %v282
        %v284 = vmul.f32 %v277, %v283
        %v285 = vsub.f32 %v268, %v262
        %v286 = vsub.f32 %v274, %v262
        %v287 = vadd.f32 %v262, 1e-07
        %v288 = vmul.f32 %v285, 0.7
        %v289 = vadd.f32 %v262, %v288
        %v290 = vmul.f32 %v286, 0.3
        %v291 = vadd.f32 %v289, %v290
        %v292 = vadd.f32 %v291, 1e-07
        %v293 = vrcp.pop %v292
        %v294 = vmul.f32 %v287, %v293
        %vm295 = vcmp.eq.s32.totalorder %v241, 0
        %v296 = vsel %vm295, %v284, %v294
        %vm297 = vcmask 8192
        %298 = vst.msk [vmem:[%s212] sm:$0x1] %vm297, %v296
        %s299 = sand.u32 %s98, 1
        %s300 = scalar_lea.sflag [#allocation4], %s299
        %s301 = sand.u32 %s98, 1
        %s302 = scalar_lea.vmem [#allocation7], %s301
        // Predicated region
        $region37: #{tpu_custom_call.1} parent=27 // pred_check
          %p303 = pneg %p108
        $region38: #{tpu_custom_call.1} parent=27 // pred_check_branch
          %305 = sbr.rel (%p303) target = $region40
        $region39: #{tpu_custom_call.1} parent=27 // pred_region
          %s307 = ssub.s32 16, 16
          %308 = vsyncadd %s300, %s307
          %s309 = smul.addr %s26, 16
          %s310 = scalar_lea.hbm %s2, %s309
          %s312 = sshll.u32 %s302, 4
          %s313 = int_to_ptr.vmem [resolvable:$true] %s312
          %315 = dma.vmem_to_hbm [thread:$0]  %s313, 16, %s310, %s300
        $region40: #{tpu_custom_call.1} parent=27 // pred_fallthru
          _
      $region28: #{tpu_custom_call.1} parent=5 // pred_fallthru
        _
      %p316 = scmp.le.s32.totalorder 2, %s17
      // Predicated region
      $region41: #{tpu_custom_call.1} parent=5 // pred_check
        %p317 = pneg %p316
      $region42: #{tpu_custom_call.1} parent=5 // pred_check_branch
        %319 = sbr.rel (%p317) target = $region44
      $region43: #{tpu_custom_call.1} parent=5 // pred_region
        %s320 = ssub.s32 %s17, 2
        // Predicated region
        $region45: #{tpu_custom_call.1} parent=43 // pred_check
          %p321 = pneg %p114
        $region46: #{tpu_custom_call.1} parent=43 // pred_check_branch
          %323 = sbr.rel (%p321) target = $region48
        $region47: #{tpu_custom_call.1} parent=43 // pred_region
          %s324 = sand.u32 %s99, 1
          %s325 = scalar_lea.sflag [#allocation4], %s324
          %s326 = sand.u32 %s99, 1
          %s327 = scalar_lea.vmem [#allocation7], %s326
          %328 = dma.done %s325, 16
        $region48: #{tpu_custom_call.1} parent=43 // pred_fallthru
          _
      $region44: #{tpu_custom_call.1} parent=5 // pred_fallthru
        _
    $region6: #{tpu_custom_call.1} parent=1 // loop_footer
      %s21 = sadd.s32 1, %s17
    $region7: #{tpu_custom_call.1} parent=1 // loop_footer_branch
      %16 = sbr.rel target = $region3
    $region8: #{tpu_custom_call.1} parent=1 // loop_exit
      _
    %329 = vsyncpa [#allocation3], 1
    %s330 = scalar_lea.sflag [#allocation3], 1
    %331 = vsyncpa %s330, 1
    %332 = vsyncpa [#allocation6], 1
    %s333 = scalar_lea.sflag [#allocation6], 1
    %334 = vsyncpa %s333, 1
    %335 = vsyncpa [#allocation4], 1
    %s336 = scalar_lea.sflag [#allocation4], 1
    %337 = vsyncpa %s336, 1

</llo_original>
